<compile_context>
chip_gen: v7x
topology: tpu7x:2x2x1
jax: 0.10.0
libtpu: 0.0.40
codegen_flags: <defaults>
</compile_context>

<pallas_src>
import functools

import jax
import jax.numpy as jnp
from jax.experimental import pallas as pl
from jax.experimental.pallas import tpu as pltpu

LANES = 128            # lane width (last dim of every block)
MAX_TILE_ROWS = 4096   # 4096 x 128 x 4 B = 2 MiB per f32 input block
NUM_CORE_SPLITS = 2    # v7x has 2 TensorCores; harmless on 1-TC chips


def _nrmse_partial_kernel(x_ref, y_ref, out_ref, err_acc, self_acc, *,
                          rows, tile_rows, tiles_per_split, mask_needed):
    """Accumulates per-lane partial sums of (x-y)^2 and x^2 for one split."""
    t = pl.program_id(1)

    @pl.when(t == 0)
    def _():
        err_acc[...] = jnp.zeros_like(err_acc)
        self_acc[...] = jnp.zeros_like(self_acc)

    # Native-dtype load, f32 math (correct on v5e which has no bf16 VPU).
    x = x_ref[...].astype(jnp.float32)
    y = y_ref[...].astype(jnp.float32)

    if mask_needed:  # static Python branch, decided at trace time
        # VPU-only filler work; this kernel has ample VALU slack (mem-bound),
        # so masking every step is cheaper than padding the tensor in HBM.
        c = pl.program_id(0)
        row0 = (c * tiles_per_split + t) * tile_rows
        rid = row0 + jax.lax.broadcasted_iota(jnp.int32, (tile_rows, LANES), 0)
        valid = rid < rows
        x = jnp.where(valid, x, 0.0)
        y = jnp.where(valid, y, 0.0)

    d = x - y
    # Row-reduced partials only: cross-vreg VPU adds + one small in-vreg
    # sublane reduce per step; no per-step cross-lane XLU log-reduce and no
    # scalar lane-0 read-modify-write.
    err_acc[...] += jnp.sum(d * d, axis=0, keepdims=True)
    self_acc[...] += jnp.sum(x * x, axis=0, keepdims=True)

    @pl.when(t == tiles_per_split - 1)
    def _():
        out_ref[0, 0:1, :] = err_acc[...]
        out_ref[0, 1:2, :] = self_acc[...]


def nrmse_loss(x: jax.Array, y: jax.Array) -> jax.Array:
    """sqrt(||x - y||^2 / ||x||^2), heavy reduction done in a Pallas kernel."""
    assert x.shape == y.shape, "X and Y must have the same shape"

    xf = x.reshape(-1)   # native dtype, no astype copy
    yf = y.reshape(-1)
    n = xf.shape[0]

    # Only pad up to the next multiple of 128 lanes (rare; no-op for typical
    # tensor sizes, so no extra HBM copy on the common path).  Tile-height
    # raggedness is handled in-kernel with a mask, never by padding.
    rem = n % LANES
    if rem:
        pad = LANES - rem
        xf = jnp.pad(xf, (0, pad))  # zeros contribute nothing to either sum
        yf = jnp.pad(yf, (0, pad))
        n += pad

    rows = n // LANES
    x2d = xf.reshape(rows, LANES)
    y2d = yf.reshape(rows, LANES)

    # Tile height: full extent for small inputs, otherwise ~2 MiB f32 blocks.
    tile_rows = rows if rows <= MAX_TILE_ROWS else MAX_TILE_ROWS

    total_tiles = pl.cdiv(rows, tile_rows)
    n_splits = min(NUM_CORE_SPLITS, total_tiles)
    tiles_per_split = pl.cdiv(total_tiles, n_splits)
    # Mask needed if any (split, tile) position runs past the valid rows.
    mask_needed = (n_splits * tiles_per_split * tile_rows) != rows
    last_tile = total_tiles - 1

    def in_index_map(c, t):
        # Clamp so out-of-range programs just re-read the last block; their
        # contribution is zeroed by the in-kernel mask.
        return (jnp.minimum(c * tiles_per_split + t, last_tile), 0)

    kernel = functools.partial(
        _nrmse_partial_kernel,
        rows=rows,
        tile_rows=tile_rows,
        tiles_per_split=tiles_per_split,
        mask_needed=mask_needed,
    )

    partials = pl.pallas_call(
        kernel,
        out_shape=jax.ShapeDtypeStruct((n_splits, 2, LANES), jnp.float32),
        grid_spec=pltpu.PrefetchScalarGridSpec(
            num_scalar_prefetch=0,
            grid=(n_splits, tiles_per_split),
            in_specs=[
                pl.BlockSpec((tile_rows, LANES), in_index_map),
                pl.BlockSpec((tile_rows, LANES), in_index_map),
            ],
            out_specs=pl.BlockSpec((1, 2, LANES), lambda c, t: (c, 0, 0)),
            scratch_shapes=[
                pltpu.VMEM((1, LANES), jnp.float32),  # per-lane error_norm
                pltpu.VMEM((1, LANES), jnp.float32),  # per-lane self_norm
            ],
        ),
        compiler_params=pltpu.CompilerParams(
            # Split axis is megacore-parallel (v7x); reduction axis is serial.
            dimension_semantics=("parallel", "arbitrary"),
            vmem_limit_bytes=32 * 1024 * 1024,
        ),
    )(x2d, y2d)

    error_norm = jnp.sum(partials[:, 0, :])
    self_norm = jnp.sum(partials[:, 1, :])
    # NOTE: NaN/Inf when ||X|| == 0 -- same behavior as the PyTorch reference.
    return jnp.sqrt(error_norm / self_norm)


if __name__ == "__main__":
    key = jax.random.PRNGKey(0)
    kx, ky = jax.random.split(key)

    # Small NCHW input consistent with the PyTorch module.
    X = jax.random.normal(kx, (2, 4, 16, 16), dtype=jnp.float32)
    Y = jax.random.normal(ky, (2, 4, 16, 16), dtype=jnp.float32)
    loss = jax.block_until_ready(nrmse_loss(X, Y))
    ref = jnp.sqrt(jnp.sum((X - Y) ** 2) / jnp.sum(X ** 2))
    assert jnp.allclose(loss, ref, rtol=1e-5, atol=1e-6), (loss, ref)

    # Secondary check: exercises multi-tile grid, dual-split and the masked
    # ragged-block path (6144 rows of 128 lanes, not a multiple of the tile).
    k2x, k2y = jax.random.split(jax.random.PRNGKey(1))
    X2 = jax.random.normal(k2x, (4, 16, 96, 128), dtype=jnp.float32)
    Y2 = jax.random.normal(k2y, (4, 16, 96, 128), dtype=jnp.float32)
    loss2 = jax.block_until_ready(nrmse_loss(X2, Y2))
    ref2 = jnp.sqrt(jnp.sum((X2 - Y2) ** 2) / jnp.sum(X2 ** 2))
    assert jnp.allclose(loss2, ref2, rtol=1e-5, atol=1e-6), (loss2, ref2)

    print("KERNEL_OK")
</pallas_src>

<mosaic_0001>
module attributes {stable_mosaic.version = 11 : i64} {
  func.func @_nrmse_partial_kernel(%arg0: i32, %arg1: i32, %arg2: memref<16x128xf32, #tpu.memory_space<vmem>>, %arg3: memref<16x128xf32, #tpu.memory_space<vmem>>, %arg4: memref<1x2x128xf32, #tpu.memory_space<vmem>>, %arg5: memref<1x128xf32, #tpu.memory_space<vmem>>, %arg6: memref<1x128xf32, #tpu.memory_space<vmem>>) attributes {dimension_semantics = [#tpu.dimension_semantics<parallel>, #tpu.dimension_semantics<arbitrary>], iteration_bounds = array<i64: 1, 1>, scalar_prefetch = 0 : i64, scratch_operands = 2 : i64, tpu.core_type = #tpu.core_type<tc>, window_params = [{transform_indices = @transform_0, window_bounds = array<i64: 16, 128>}, {transform_indices = @transform_1, window_bounds = array<i64: 16, 128>}, {transform_indices = @transform_2, window_bounds = array<i64: 1, 2, 128>}]} {
    %c0_i32 = arith.constant 0 : i32
    %0 = arith.cmpi eq, %arg1, %c0_i32 : i32
    %1 = arith.extui %0 : i1 to i32
    %c0_i32_0 = arith.constant 0 : i32
    %2 = arith.cmpi ne, %1, %c0_i32_0 : i32
    scf.if %2 {
      %cst_15 = arith.constant 0.000000e+00 : f32
      %21 = vector.broadcast %cst_15 : f32 to vector<1x128xf32>
      %c0_16 = arith.constant 0 : index
      %c0_17 = arith.constant 0 : index
      %22 = vector.load %arg5[%c0_16, %c0_17] : memref<1x128xf32, #tpu.memory_space<vmem>>, vector<1x128xf32>
      tpu.vector_store %arg5[%c0_16, %c0_17], %21 {strides = array<i32>} : memref<1x128xf32, #tpu.memory_space<vmem>>, vector<1x128xf32>,
      %cst_18 = arith.constant 0.000000e+00 : f32
      %23 = vector.broadcast %cst_18 : f32 to vector<1x128xf32>
      %c0_19 = arith.constant 0 : index
      %c0_20 = arith.constant 0 : index
      %24 = vector.load %arg6[%c0_19, %c0_20] : memref<1x128xf32, #tpu.memory_space<vmem>>, vector<1x128xf32>
      tpu.vector_store %arg6[%c0_19, %c0_20], %23 {strides = array<i32>} : memref<1x128xf32, #tpu.memory_space<vmem>>, vector<1x128xf32>,
    } else {
    }
    %c0 = arith.constant 0 : index
    %c0_1 = arith.constant 0 : index
    %3 = vector.load %arg2[%c0, %c0_1] : memref<16x128xf32, #tpu.memory_space<vmem>>, vector<16x128xf32>
    %c0_2 = arith.constant 0 : index
    %c0_3 = arith.constant 0 : index
    %4 = vector.load %arg3[%c0_2, %c0_3] : memref<16x128xf32, #tpu.memory_space<vmem>>, vector<16x128xf32>
    %5 = arith.subf %3, %4 : vector<16x128xf32>
    %c0_4 = arith.constant 0 : index
    %c0_5 = arith.constant 0 : index
    %6 = vector.load %arg5[%c0_4, %c0_5] : memref<1x128xf32, #tpu.memory_space<vmem>>, vector<1x128xf32>
    %7 = arith.mulf %5, %5 : vector<16x128xf32>
    %cst = arith.constant dense<0.000000e+00> : vector<128xf32>
    %8 = vector.multi_reduction <add>, %7, %cst [0] : vector<16x128xf32> to vector<128xf32>
    %9 = vector.shape_cast %8 : vector<128xf32> to vector<1x128xf32>
    %10 = arith.addf %6, %9 : vector<1x128xf32>
    %c0_6 = arith.constant 0 : index
    %c0_7 = arith.constant 0 : index
    %11 = vector.load %arg5[%c0_6, %c0_7] : memref<1x128xf32, #tpu.memory_space<vmem>>, vector<1x128xf32>
    tpu.vector_store %arg5[%c0_6, %c0_7], %10 {strides = array<i32>} : memref<1x128xf32, #tpu.memory_space<vmem>>, vector<1x128xf32>,
    %c0_8 = arith.constant 0 : index
    %c0_9 = arith.constant 0 : index
    %12 = vector.load %arg6[%c0_8, %c0_9] : memref<1x128xf32, #tpu.memory_space<vmem>>, vector<1x128xf32>
    %13 = arith.mulf %3, %3 : vector<16x128xf32>
    %cst_10 = arith.constant dense<0.000000e+00> : vector<128xf32>
    %14 = vector.multi_reduction <add>, %13, %cst_10 [0] : vector<16x128xf32> to vector<128xf32>
    %15 = vector.shape_cast %14 : vector<128xf32> to vector<1x128xf32>
    %16 = arith.addf %12, %15 : vector<1x128xf32>
    %c0_11 = arith.constant 0 : index
    %c0_12 = arith.constant 0 : index
    %17 = vector.load %arg6[%c0_11, %c0_12] : memref<1x128xf32, #tpu.memory_space<vmem>>, vector<1x128xf32>
    tpu.vector_store %arg6[%c0_11, %c0_12], %16 {strides = array<i32>} : memref<1x128xf32, #tpu.memory_space<vmem>>, vector<1x128xf32>,
    %c0_i32_13 = arith.constant 0 : i32
    %18 = arith.cmpi eq, %arg1, %c0_i32_13 : i32
    %19 = arith.extui %18 : i1 to i32
    %c0_i32_14 = arith.constant 0 : i32
    %20 = arith.cmpi ne, %19, %c0_i32_14 : i32
    scf.if %20 {
      %c0_15 = arith.constant 0 : index
      %c0_16 = arith.constant 0 : index
      %21 = vector.load %arg5[%c0_15, %c0_16] : memref<1x128xf32, #tpu.memory_space<vmem>>, vector<1x128xf32>
      %c0_17 = arith.constant 0 : index
      %c0_18 = arith.constant 0 : index
      %c0_19 = arith.constant 0 : index
      %22 = vector.load %arg4[%c0_17, %c0_18, %c0_19] : memref<1x2x128xf32, #tpu.memory_space<vmem>>, vector<1x1x128xf32>
      %23 = vector.shape_cast %22 : vector<1x1x128xf32> to vector<1x128xf32>
      %24 = vector.shape_cast %21 : vector<1x128xf32> to vector<1x1x128xf32>
      tpu.vector_store %arg4[%c0_17, %c0_18, %c0_19], %24 {strides = array<i32>} : memref<1x2x128xf32, #tpu.memory_space<vmem>>, vector<1x1x128xf32>,
      %c0_20 = arith.constant 0 : index
      %c0_21 = arith.constant 0 : index
      %25 = vector.load %arg6[%c0_20, %c0_21] : memref<1x128xf32, #tpu.memory_space<vmem>>, vector<1x128xf32>
      %c0_22 = arith.constant 0 : index
      %c1 = arith.constant 1 : index
      %c0_23 = arith.constant 0 : index
      %26 = vector.load %arg4[%c0_22, %c1, %c0_23] : memref<1x2x128xf32, #tpu.memory_space<vmem>>, vector<1x1x128xf32>
      %27 = vector.shape_cast %26 : vector<1x1x128xf32> to vector<1x128xf32>
      %28 = vector.shape_cast %25 : vector<1x128xf32> to vector<1x1x128xf32>
      tpu.vector_store %arg4[%c0_22, %c1, %c0_23], %28 {strides = array<i32>} : memref<1x2x128xf32, #tpu.memory_space<vmem>>, vector<1x1x128xf32>,
    } else {
    }
    return
  }
  func.func @transform_0(%arg0: i32, %arg1: i32) -> (i32, i32) {
    %c1_i32 = arith.constant 1 : i32
    %0 = arith.muli %arg0, %c1_i32 : i32
    %1 = arith.addi %0, %arg1 : i32
    %c0_i32 = arith.constant 0 : i32
    %2 = arith.minsi %1, %c0_i32 : i32
    %c0_i32_0 = arith.constant 0 : i32
    %c0_i32_1 = arith.constant 0 : i32
    return %2, %c0_i32_0 : i32, i32
  }
  func.func @transform_1(%arg0: i32, %arg1: i32) -> (i32, i32) {
    %c1_i32 = arith.constant 1 : i32
    %0 = arith.muli %arg0, %c1_i32 : i32
    %1 = arith.addi %0, %arg1 : i32
    %c0_i32 = arith.constant 0 : i32
    %2 = arith.minsi %1, %c0_i32 : i32
    %c0_i32_0 = arith.constant 0 : i32
    %c0_i32_1 = arith.constant 0 : i32
    return %2, %c0_i32_0 : i32, i32
  }
  func.func @transform_2(%arg0: i32, %arg1: i32) -> (i32, i32, i32) {
    %c0_i32 = arith.constant 0 : i32
    %c0_i32_0 = arith.constant 0 : i32
    %c0_i32_1 = arith.constant 0 : i32
    return %arg0, %c0_i32, %c0_i32_0 : i32, i32, i32
  }
}

</mosaic_0001>

<llo_original>
// kernel: tpu_custom_call.1
$region0: #{tpu_custom_call.1}
  #allocation0 [shape = 'u32[]', space=smem, size = 0x4, offset = 0x4, fixed_abs, tag = 'smem constant byte address 0x4 - core index']
  #allocation1 [shape = 'u32[144,128]{1,0:T(1,128)}', space=vmem, size = 0x12000, scoped, tag = 'internal scratch']
  #allocation2 [shape = 'f32[1,128]{1,0:T(1,128)}', space=vmem, size = 0x200, scoped, tag = 'scratch operand']
  #allocation3 [shape = 'f32[1,128]{1,0:T(1,128)}', space=vmem, size = 0x200, scoped, tag = 'scratch operand']
  %s0 = inlined_call_operand.hbm [shape: f32[16,128], index: 0, kind: input, shape index: {}]
  %s1 = inlined_call_operand.hbm [shape: f32[16,128], index: 1, kind: input, shape index: {}]
  %s2 = inlined_call_operand.hbm [shape: f32[1,2,128], index: 2, kind: output, shape index: {}]
  %s3 = sld [smem:[#allocation0]]
  $region34: #{tpu_custom_call.1} parent=0
    _
  %s5 = ssub.s32 1, %s3
  %s6 = scalar_select 0, %s5, %s3
  $region1: #{tpu_custom_call.1} parent=0
    #allocation4 [shape = 'u8[8192]{0}', space=vmem, size = 0x2000, scoped, tag = 'input window, operand 0, single buffered']
    #allocation5 [shape = 's32[1]{0}', space=sflag, size = 0x4, scoped, tag = 'scoped memory for tpu_custom_call.1']
    #allocation6 [shape = 's32[1]{0}', space=sflag, size = 0x4, scoped, tag = 'scoped memory for tpu_custom_call.1']
    #allocation7 [shape = 'u8[8192]{0}', space=vmem, size = 0x2000, scoped, tag = 'input window, operand 1, single buffered']
    #allocation8 [shape = 's32[1]{0}', space=sflag, size = 0x4, scoped, tag = 'scoped memory for tpu_custom_call.1']
    #allocation9 [shape = 'u8[1024]{0}', space=vmem, size = 0x400, scoped, tag = 'output window, operand 0, single buffered']
    %7 = vsyncpa [#allocation5], 0
    %8 = vsyncpa [#allocation8], 0
    %9 = vsyncpa [#allocation6], 0
    // Predicated region
    $region2: #{tpu_custom_call.1} parent=1 // pred_check
      _
    $region3: #{tpu_custom_call.1} parent=1 // pred_check_branch
      %11 = sbr.rel (0) target = $region5
    $region4: #{tpu_custom_call.1} parent=1 // pred_region
      %s12 = sadd.s32 0, 0
      %p13 = scmp.lt.s32.totalorder %s12, 0
      %s14 = scalar_select %p13, %s12, 0
      %s15 = smul.u32 2, %s14
      %s17 = ssub.s32 256, 256
      %18 = vsyncadd [#allocation5], %s17
      %s19 = smul.addr %s15, 128
      %s20 = scalar_lea.hbm %s0, %s19
      %s21 = sshll.u32 [#allocation4], 4
      %s22 = int_to_ptr.vmem [resolvable:$true] %s21
      %27 = dma.hbm_to_vmem [thread:$0]  %s20, 256, %s22, [#allocation5], 128, 128, 8
    $region5: #{tpu_custom_call.1} parent=1 // pred_fallthru
      _
    // Predicated region
    $region6: #{tpu_custom_call.1} parent=1 // pred_check
      _
    $region7: #{tpu_custom_call.1} parent=1 // pred_check_branch
      %29 = sbr.rel (0) target = $region9
    $region8: #{tpu_custom_call.1} parent=1 // pred_region
      %s30 = sadd.s32 0, 0
      %p31 = scmp.lt.s32.totalorder %s30, 0
      %s32 = scalar_select %p31, %s30, 0
      %s33 = smul.u32 2, %s32
      %s35 = ssub.s32 256, 256
      %36 = vsyncadd [#allocation8], %s35
      %s37 = smul.addr %s33, 128
      %s38 = scalar_lea.hbm %s1, %s37
      %s39 = sshll.u32 [#allocation7], 4
      %s40 = int_to_ptr.vmem [resolvable:$true] %s39
      %45 = dma.hbm_to_vmem [thread:$0]  %s38, 256, %s40, [#allocation8], 128, 128, 8
    $region9: #{tpu_custom_call.1} parent=1 // pred_fallthru
      _
    // Predicated region
    $region10: #{tpu_custom_call.1} parent=1 // pred_check
      _
    $region11: #{tpu_custom_call.1} parent=1 // pred_check_branch
      %47 = sbr.rel (0) target = $region13
    $region12: #{tpu_custom_call.1} parent=1 // pred_region
      %48 = dma.done [#allocation5], 256
    $region13: #{tpu_custom_call.1} parent=1 // pred_fallthru
      _
    // Predicated region
    $region14: #{tpu_custom_call.1} parent=1 // pred_check
      _
    $region15: #{tpu_custom_call.1} parent=1 // pred_check_branch
      %50 = sbr.rel (0) target = $region17
    $region16: #{tpu_custom_call.1} parent=1 // pred_region
      %51 = dma.done [#allocation8], 256
    $region17: #{tpu_custom_call.1} parent=1 // pred_fallthru
      _
    %s52 = sadd.s32 0, 0
    %p53 = scmp.lt.s32.totalorder %s52, 0
    %s54 = scalar_select %p53, %s52, 0
    %s55 = smul.u32 2, %s54
    %s56 = sadd.s32 0, 0
    %p57 = scmp.lt.s32.totalorder %s56, 0
    %s58 = scalar_select %p57, %s56, 0
    %s59 = smul.u32 2, %s58
    %p60 = scmp.eq.s32.totalorder 0, 0
    // Predicated region
    $region18: #{tpu_custom_call.1} parent=1 // pred_check
      %p61 = pneg %p60
    $region19: #{tpu_custom_call.1} parent=1 // pred_check_branch
      %63 = sbr.rel (%p61) target = $region21
    $region20: #{tpu_custom_call.1} parent=1 // pred_region
      %64 = vst [vmem:[#allocation2] sm:$0x1] 0.0
      %65 = vst [vmem:[#allocation3] sm:$0x1] 0.0
    $region21: #{tpu_custom_call.1} parent=1 // pred_fallthru
      _
    %v66 = vld [vmem:[#allocation4] sm:$0xff]
    %v67 = vld [vmem:[#allocation4 + $0x8] sm:$0xff]
    %v68 = vld [vmem:[#allocation7] sm:$0xff]
    %v69 = vld [vmem:[#allocation7 + $0x8] sm:$0xff]
    %v70 = vsub.f32 %v66, %v68
    %v71 = vsub.f32 %v67, %v69
    %v72 = vld [vmem:[#allocation2] sm:$0x1]
    %v73 = vmul.f32 %v70, %v70
    %v74 = vmul.f32 %v71, %v71
    %v75 = vadd.f32 %v73, %v74
    %v76 = vrot.slane %v75, 4
    %v77 = vadd.f32 %v75, %v76
    %v78 = vrot.slane %v77, 2
    %v79 = vadd.f32 %v77, %v78
    %v80 = vrot.slane %v79, 1
    %v81 = vadd.f32 %v79, %v80
    %v82 = vadd.f32 %v72, %v81
    %83 = vst [vmem:[#allocation2] sm:$0x1] %v82
    %v84 = vld [vmem:[#allocation3] sm:$0x1]
    %v85 = vmul.f32 %v66, %v66
    %v86 = vmul.f32 %v67, %v67
    %v87 = vadd.f32 %v85, %v86
    %v88 = vrot.slane %v87, 4
    %v89 = vadd.f32 %v87, %v88
    %v90 = vrot.slane %v89, 2
    %v91 = vadd.f32 %v89, %v90
    %v92 = vrot.slane %v91, 1
    %v93 = vadd.f32 %v91, %v92
    %v94 = vadd.f32 %v84, %v93
    %95 = vst [vmem:[#allocation3] sm:$0x1] %v94
    // Predicated region
    $region22: #{tpu_custom_call.1} parent=1 // pred_check
      %p96 = pneg %p60
    $region23: #{tpu_custom_call.1} parent=1 // pred_check_branch
      %98 = sbr.rel (%p96) target = $region25
    $region24: #{tpu_custom_call.1} parent=1 // pred_region
      %v99 = vld [vmem:[#allocation2] sm:$0x1]
      %100 = vst [vmem:[#allocation9] sm:$0x1] %v99
      %v101 = vld [vmem:[#allocation3] sm:$0x1]
      %102 = vst [vmem:[#allocation9 + $0x1] sm:$0x1] %v101
    $region25: #{tpu_custom_call.1} parent=1 // pred_fallthru
      _
    // Predicated region
    $region26: #{tpu_custom_call.1} parent=1 // pred_check
      _
    $region27: #{tpu_custom_call.1} parent=1 // pred_check_branch
      %104 = sbr.rel (0) target = $region29
    $region28: #{tpu_custom_call.1} parent=1 // pred_region
      %s106 = ssub.s32 32, 32
      %107 = vsyncadd [#allocation6], %s106
      %s109 = sshll.u32 [#allocation9], 4
      %s110 = int_to_ptr.vmem [resolvable:$true] %s109
      %112 = dma.vmem_to_hbm [thread:$0]  %s110, 32, %s2, [#allocation6]
    $region29: #{tpu_custom_call.1} parent=1 // pred_fallthru
      _
    // Predicated region
    $region30: #{tpu_custom_call.1} parent=1 // pred_check
      _
    $region31: #{tpu_custom_call.1} parent=1 // pred_check_branch
      %114 = sbr.rel (0) target = $region33
    $region32: #{tpu_custom_call.1} parent=1 // pred_region
      %115 = dma.done [#allocation6], 32
    $region33: #{tpu_custom_call.1} parent=1 // pred_fallthru
      _
    %116 = vsyncpa [#allocation5], 1
    %117 = vsyncpa [#allocation8], 1
    %118 = vsyncpa [#allocation6], 1

</llo_original>
